<compile_context>
chip_gen: v7x
topology: tpu7x:2x2x1
jax: 0.10.0
libtpu: 0.0.40
codegen_flags: <defaults>
</compile_context>

<pallas_src>
import functools

import jax
import jax.numpy as jnp
from jax.experimental import pallas as pl
from jax.experimental.pallas import tpu as pltpu


def _round_up(v: int, m: int) -> int:
    return ((v + m - 1) // m) * m


def _pool_kernel(x_ref, p_ref, acc_ref, *, inv_hw):
    """Tiled global-average-pool.

    x_ref:   (Bt, C, THW)  input tile (any float dtype)
    p_ref:   (Bt, C, 1)    f32 pooled mean (written on the last HW step)
    acc_ref: (Bt, C, 1)    f32 running-sum scratch (resident across HW steps)
    """
    h = pl.program_id(1)

    @pl.when(h == 0)
    def _():
        acc_ref[...] = jnp.zeros_like(acc_ref)

    xb = x_ref[...]
    # f32 accumulation; the cast fuses per-vreg (no-op for f32 inputs), so no
    # full-precision copy of the (C, THW) block is materialized.
    acc_ref[...] += jnp.sum(xb.astype(jnp.float32), axis=-1, keepdims=True)

    @pl.when(h == pl.num_programs(1) - 1)
    def _():
        p_ref[...] = acc_ref[...] * inv_hw


def _scale_kernel(x_ref, y_ref, o_ref):
    """out = x * y, broadcasting the per-(b, c) gate across the lane (HW) axis.

    x_ref/o_ref: (Bt, C, THW)    y_ref: (Bt, C, 1) f32
    The multiply runs in the input dtype (bf16 stays bf16 on v6e/v7x VPUs).
    """
    xb = x_ref[...]
    o_ref[...] = xb * y_ref[...].astype(xb.dtype)


def ca_layer_v2(x, w1, w2, *, block_hw=512, block_b=None):
    """CALayerV2 forward.  x: (B, C, H, W); w1: (C*factor, C); w2: (C, C*factor)."""
    B, C, H, W = x.shape
    HW = H * W
    CF, C1 = w1.shape
    assert C1 == C and w2.shape == (C, CF)

    # Batch tile: largest divisor of B that is <= 8 (amortizes per-step overhead
    # while keeping per-step, double-buffered VMEM bounded for v7x's 64 MiB).
    if block_b is None:
        block_b = max(d for d in range(1, min(B, 8) + 1) if B % d == 0)
    Bt = block_b
    assert B % Bt == 0
    n_b = B // Bt

    # Lane-dense spatial tiling: tile is a multiple of 128 lanes; pad HW up to a
    # multiple of the tile.  Zero padding does not perturb the mean because we
    # divide by the true HW, and the padded output region is sliced off.
    thw = min(_round_up(block_hw, 128), _round_up(HW, 128))
    hwp = _round_up(HW, thw)
    n_hw = hwp // thw

    x2 = x.reshape(B, C, HW)
    if hwp != HW:
        x2 = jnp.pad(x2, ((0, 0), (0, 0), (0, hwp - HW)))

    # ---- pass 1: tiled global average pool (Pallas) ------------------------
    pooled = pl.pallas_call(
        functools.partial(_pool_kernel, inv_hw=1.0 / HW),
        out_shape=jax.ShapeDtypeStruct((B, C, 1), jnp.float32),
        grid_spec=pltpu.PrefetchScalarGridSpec(
            num_scalar_prefetch=0,
            grid=(n_b, n_hw),
            in_specs=[pl.BlockSpec((Bt, C, thw), lambda b, h: (b, 0, h))],
            out_specs=pl.BlockSpec((Bt, C, 1), lambda b, h: (b, 0, 0)),
            scratch_shapes=[pltpu.VMEM((Bt, C, 1), jnp.float32)],
        ),
        compiler_params=pltpu.CompilerParams(
            dimension_semantics=("parallel", "arbitrary")),
    )(x2)

    # ---- tiny 1x1 convs on the pooled vector (lane-dense, batched over B) ---
    # (B,C) @ (C,CF) -> relu -> contract CF against w2 kept as (C,CF) -> sigmoid.
    # A few KFLOPs total; per the review this stays in XLA rather than running
    # an under-utilized (CF,C)@(C,1) GEMV inside every grid step.
    p2 = pooled.reshape(B, C)
    w1t = w1.astype(jnp.float32).T          # (C, CF)  lane-dense weight layout
    w2f = w2.astype(jnp.float32)            # (C, CF)  already lane-dense
    hid = jnp.maximum(p2 @ w1t, 0.0)                                   # (B, CF)
    gate = jax.nn.sigmoid(
        jax.lax.dot_general(hid, w2f, (((1,), (1,)), ((), ()))))       # (B, C)
    gate3 = gate.reshape(B, C, 1)

    # ---- pass 2: channel-wise rescale (Pallas, both grid axes parallel) -----
    out = pl.pallas_call(
        _scale_kernel,
        out_shape=jax.ShapeDtypeStruct((B, C, hwp), x.dtype),
        grid_spec=pltpu.PrefetchScalarGridSpec(
            num_scalar_prefetch=0,
            grid=(n_b, n_hw),
            in_specs=[
                pl.BlockSpec((Bt, C, thw), lambda b, h: (b, 0, h)),
                pl.BlockSpec((Bt, C, 1), lambda b, h: (b, 0, 0)),
            ],
            out_specs=pl.BlockSpec((Bt, C, thw), lambda b, h: (b, 0, h)),
        ),
        compiler_params=pltpu.CompilerParams(
            dimension_semantics=("parallel", "parallel")),
    )(x2, gate3)

    if hwp != HW:
        out = out[:, :, :HW]
    return out.reshape(B, C, H, W)


def ca_layer_v2_ref(x, w1, w2):
    """Pure-JAX reference matching the PyTorch CALayerV2 forward."""
    pooled = jnp.mean(x, axis=(2, 3))                     # (B, C)
    h = jnp.maximum(pooled @ w1.T, 0.0)                   # (B, CF)
    y = jax.nn.sigmoid(h @ w2.T)                          # (B, C)
    return x * y[:, :, None, None]


if __name__ == "__main__":
    B, C, H, W = 2, 4, 16, 16
    factor = 128
    CF = C * factor

    key = jax.random.PRNGKey(0)
    kx, k1, k2 = jax.random.split(key, 3)

    x = jax.random.normal(kx, (B, C, H, W), dtype=jnp.float32)
    # Deterministic weight init (~kaiming-ish scale); 1x1 convs have no bias.
    w1 = jax.random.normal(k1, (CF, C), dtype=jnp.float32) * (1.0 / jnp.sqrt(C))
    w2 = jax.random.normal(k2, (C, CF), dtype=jnp.float32) * (1.0 / jnp.sqrt(CF))

    out = ca_layer_v2(x, w1, w2)
    out = jax.block_until_ready(out)

    ref = ca_layer_v2_ref(x, w1, w2)
    assert out.shape == (B, C, H, W)
    assert jnp.allclose(out, ref, atol=1e-5, rtol=1e-5), "mismatch vs reference"

    print("KERNEL_OK")
</pallas_src>

<mosaic_0001>
module attributes {stable_mosaic.version = 11 : i64} {
  func.func @_pool_kernel(%arg0: i32, %arg1: i32, %arg2: memref<2x4x256xf32, #tpu.memory_space<vmem>>, %arg3: memref<2x4x1xf32, #tpu.memory_space<vmem>>, %arg4: memref<2x4x1xf32, #tpu.memory_space<vmem>>) attributes {dimension_semantics = [#tpu.dimension_semantics<parallel>, #tpu.dimension_semantics<arbitrary>], iteration_bounds = array<i64: 1, 1>, scalar_prefetch = 0 : i64, scratch_operands = 1 : i64, tpu.core_type = #tpu.core_type<tc>, window_params = [{transform_indices = @transform_0, window_bounds = array<i64: 2, 4, 256>}, {transform_indices = @transform_1, window_bounds = array<i64: 2, 4, 1>}]} {
    %c0_i32 = arith.constant 0 : i32
    %0 = arith.cmpi eq, %arg1, %c0_i32 : i32
    %1 = arith.extui %0 : i1 to i32
    %c0_i32_0 = arith.constant 0 : i32
    %2 = arith.cmpi ne, %1, %c0_i32_0 : i32
    scf.if %2 {
      %cst_11 = arith.constant 0.000000e+00 : f32
      %12 = vector.broadcast %cst_11 : f32 to vector<2x4x1xf32>
      %c0_12 = arith.constant 0 : index
      %c0_13 = arith.constant 0 : index
      %c0_14 = arith.constant 0 : index
      %13 = vector.load %arg4[%c0_12, %c0_13, %c0_14] : memref<2x4x1xf32, #tpu.memory_space<vmem>>, vector<2x4x1xf32>
      tpu.vector_store %arg4[%c0_12, %c0_13, %c0_14], %12 {strides = array<i32>} : memref<2x4x1xf32, #tpu.memory_space<vmem>>, vector<2x4x1xf32>,
    } else {
    }
    %c0 = arith.constant 0 : index
    %c0_1 = arith.constant 0 : index
    %c0_2 = arith.constant 0 : index
    %3 = vector.load %arg2[%c0, %c0_1, %c0_2] : memref<2x4x256xf32, #tpu.memory_space<vmem>>, vector<2x4x256xf32>
    %c0_3 = arith.constant 0 : index
    %c0_4 = arith.constant 0 : index
    %c0_5 = arith.constant 0 : index
    %4 = vector.load %arg4[%c0_3, %c0_4, %c0_5] : memref<2x4x1xf32, #tpu.memory_space<vmem>>, vector<2x4x1xf32>
    %cst = arith.constant dense<0.000000e+00> : vector<2x4xf32>
    %5 = vector.multi_reduction <add>, %3, %cst [2] : vector<2x4x256xf32> to vector<2x4xf32>
    %6 = vector.shape_cast %5 : vector<2x4xf32> to vector<2x4x1xf32>
    %7 = arith.addf %4, %6 : vector<2x4x1xf32>
    %c0_6 = arith.constant 0 : index
    %c0_7 = arith.constant 0 : index
    %c0_8 = arith.constant 0 : index
    %8 = vector.load %arg4[%c0_6, %c0_7, %c0_8] : memref<2x4x1xf32, #tpu.memory_space<vmem>>, vector<2x4x1xf32>
    tpu.vector_store %arg4[%c0_6, %c0_7, %c0_8], %7 {strides = array<i32>} : memref<2x4x1xf32, #tpu.memory_space<vmem>>, vector<2x4x1xf32>,
    %c0_i32_9 = arith.constant 0 : i32
    %9 = arith.cmpi eq, %arg1, %c0_i32_9 : i32
    %10 = arith.extui %9 : i1 to i32
    %c0_i32_10 = arith.constant 0 : i32
    %11 = arith.cmpi ne, %10, %c0_i32_10 : i32
    scf.if %11 {
      %c0_11 = arith.constant 0 : index
      %c0_12 = arith.constant 0 : index
      %c0_13 = arith.constant 0 : index
      %12 = vector.load %arg4[%c0_11, %c0_12, %c0_13] : memref<2x4x1xf32, #tpu.memory_space<vmem>>, vector<2x4x1xf32>
      %cst_14 = arith.constant 3.906250e-03 : f32
      %13 = vector.broadcast %cst_14 : f32 to vector<2x4x1xf32>
      %14 = arith.mulf %12, %13 : vector<2x4x1xf32>
      %c0_15 = arith.constant 0 : index
      %c0_16 = arith.constant 0 : index
      %c0_17 = arith.constant 0 : index
      %15 = vector.load %arg3[%c0_15, %c0_16, %c0_17] : memref<2x4x1xf32, #tpu.memory_space<vmem>>, vector<2x4x1xf32>
      tpu.vector_store %arg3[%c0_15, %c0_16, %c0_17], %14 {strides = array<i32>} : memref<2x4x1xf32, #tpu.memory_space<vmem>>, vector<2x4x1xf32>,
    } else {
    }
    return
  }
  func.func @transform_0(%arg0: i32, %arg1: i32) -> (i32, i32, i32) {
    %c0_i32 = arith.constant 0 : i32
    %c0_i32_0 = arith.constant 0 : i32
    return %arg0, %c0_i32, %arg1 : i32, i32, i32
  }
  func.func @transform_1(%arg0: i32, %arg1: i32) -> (i32, i32, i32) {
    %c0_i32 = arith.constant 0 : i32
    %c0_i32_0 = arith.constant 0 : i32
    %c0_i32_1 = arith.constant 0 : i32
    return %arg0, %c0_i32, %c0_i32_0 : i32, i32, i32
  }
}

</mosaic_0001>

<llo_original>
// kernel: tpu_custom_call.1
$region0: #{tpu_custom_call.1}
  #allocation0 [shape = 'u32[]', space=smem, size = 0x4, offset = 0x4, fixed_abs, tag = 'smem constant byte address 0x4 - core index']
  #allocation1 [shape = 'u32[144,128]{1,0:T(1,128)}', space=vmem, size = 0x12000, scoped, tag = 'internal scratch']
  #allocation2 [shape = 'f32[2,4,1]{2,1,0:T(4,128)}', space=vmem, size = 0x1000, scoped, tag = 'scratch operand']
  %s0 = inlined_call_operand.hbm [shape: f32[2,4,256], index: 0, kind: input, shape index: {}]
  %s1 = inlined_call_operand.vmem [shape: f32[2,4,1], index: 1, kind: output, shape index: {}]
  %s2 = sld [smem:[#allocation0]]
  $region26: #{tpu_custom_call.1} parent=0
    _
  %s4 = ssub.s32 1, %s2
  %s5 = scalar_select 0, %s4, %s2
  $region1: #{tpu_custom_call.1} parent=0
    #allocation3 [shape = 'u8[8192]{0}', space=vmem, size = 0x2000, scoped, tag = 'input window, operand 0, single buffered']
    #allocation4 [shape = 's32[1]{0}', space=sflag, size = 0x4, scoped, tag = 'scoped memory for tpu_custom_call.1']
    %6 = vsyncpa [#allocation4], 0
    // Predicated region
    $region2: #{tpu_custom_call.1} parent=1 // pred_check
      _
    $region3: #{tpu_custom_call.1} parent=1 // pred_check_branch
      %8 = sbr.rel (0) target = $region5
    $region4: #{tpu_custom_call.1} parent=1 // pred_region
      %s10 = ssub.s32 256, 256
      %11 = vsyncadd [#allocation4], %s10
      %s12 = sshll.u32 [#allocation3], 4
      %s13 = int_to_ptr.vmem [resolvable:$true] %s12
      %18 = dma.hbm_to_vmem [thread:$0]  %s0, 256, %s13, [#allocation4], 128, 128, 8
    $region5: #{tpu_custom_call.1} parent=1 // pred_fallthru
      _
    // Predicated region
    $region6: #{tpu_custom_call.1} parent=1 // pred_check
      _
    $region7: #{tpu_custom_call.1} parent=1 // pred_check_branch
      %20 = sbr.rel (0) target = $region9
    $region8: #{tpu_custom_call.1} parent=1 // pred_region
      %21 = dma.done [#allocation4], 256
    $region9: #{tpu_custom_call.1} parent=1 // pred_fallthru
      _
    %p22 = scmp.eq.s32.totalorder 0, 0
    // Predicated region
    $region10: #{tpu_custom_call.1} parent=1 // pred_check
      %p23 = pneg %p22
    $region11: #{tpu_custom_call.1} parent=1 // pred_check_branch
      %25 = sbr.rel (%p23) target = $region13
    $region12: #{tpu_custom_call.1} parent=1 // pred_region
      %vm26 = vcmask 3072
      %27 = vst.msk [vmem:[#allocation2] sm:$0xf] %vm26, 0.0
      %28 = vst.msk [vmem:[#allocation2 + $0x4] sm:$0xf] %vm26, 0.0
    $region13: #{tpu_custom_call.1} parent=1 // pred_fallthru
      _
    %v29 = vld [vmem:[#allocation3] sm:$0xff]
    %v30 = vld [vmem:[#allocation3 + $0x8] sm:$0xff]
    %v31 = vld [vmem:[#allocation2] sm:$0xf]
    %v32 = vld [vmem:[#allocation2 + $0x4] sm:$0xf]
    %v35 = vcombine.high %v29, %v29
    %v36 = vcombine.high %v30, %v30
    %vm39 = vcmask 1043456
    %v40 = vsel %vm39, %v29, 0.0
    %v41 = vsel %vm39, %v35, 0.0
    %v42 = vadd.f32 %v40, %v41
    %43 = vadd.xlane.f32.xlu0 %v42
    %v44 = vpop.xlane.xlu0 %43
    %v45 = vsel %vm39, %v30, 0.0
    %v46 = vsel %vm39, %v36, 0.0
    %v47 = vadd.f32 %v45, %v46
    %48 = vadd.xlane.f32.xlu0 %v47
    %v49 = vpop.xlane.xlu0 %48
    %v50 = vadd.f32 %v31, %v44
    %v51 = vadd.f32 %v32, %v49
    %vm52 = vcmask 3072
    %53 = vst.msk [vmem:[#allocation2] sm:$0xf] %vm52, %v50
    %54 = vst.msk [vmem:[#allocation2 + $0x4] sm:$0xf] %vm52, %v51
    // Predicated region
    $region14: #{tpu_custom_call.1} parent=1 // pred_check
      %p55 = pneg %p22
    $region15: #{tpu_custom_call.1} parent=1 // pred_check_branch
      %57 = sbr.rel (%p55) target = $region17
    $region16: #{tpu_custom_call.1} parent=1 // pred_region
      %v58 = vld [vmem:[#allocation2] sm:$0xf]
      %v59 = vld [vmem:[#allocation2 + $0x4] sm:$0xf]
      %v60 = vmul.f32 %v58, 0.00390625
      %v61 = vmul.f32 %v59, 0.00390625
      %62 = vst.msk [vmem:[%s1] sm:$0xf] %vm52, %v60
      %63 = vst.msk [vmem:[%s1 + $0x4] sm:$0xf] %vm52, %v61
    $region17: #{tpu_custom_call.1} parent=1 // pred_fallthru
      _
    // Predicated region
    $region18: #{tpu_custom_call.1} parent=1 // pred_check
      _
    $region19: #{tpu_custom_call.1} parent=1 // pred_check_branch
      %65 = sbr.rel (0) target = $region21
    $region20: #{tpu_custom_call.1} parent=1 // pred_region
      _
    $region21: #{tpu_custom_call.1} parent=1 // pred_fallthru
      _
    // Predicated region
    $region22: #{tpu_custom_call.1} parent=1 // pred_check
      _
    $region23: #{tpu_custom_call.1} parent=1 // pred_check_branch
      %67 = sbr.rel (0) target = $region25
    $region24: #{tpu_custom_call.1} parent=1 // pred_region
      _
    $region25: #{tpu_custom_call.1} parent=1 // pred_fallthru
      _
    %68 = vsyncpa [#allocation4], 1

</llo_original>
